<compile_context>
chip_gen: v7x
topology: tpu7x:2x2x1
jax: 0.10.0
libtpu: 0.0.40
codegen_flags: <defaults>
</compile_context>

<pallas_src>
import functools

import jax
import jax.numpy as jnp
from jax.experimental import pallas as pl
from jax.experimental.pallas import tpu as pltpu


def channel_attention_kernel(x_ref, w1_ref, w2_ref, o_ref, sum_acc, max_acc,
                             *, hw_true, tile):
    # x_ref   : (1, C, tile)  input chunk (batch b, spatial tile h)
    # w1_ref  : (Cr, C)       fc1 1x1-conv weight
    # w2_ref  : (C, Cr)       fc2 1x1-conv weight
    # o_ref   : (1, C, 1)     sigmoid(fc(avg) + fc(max)) for batch b
    # sum_acc : (C, tile) f32 running partial sums   (VMEM scratch)
    # max_acc : (C, tile) f32 running partial maxes  (VMEM scratch)
    h = pl.program_id(1)
    n_hw = pl.num_programs(1)

    @pl.when(h == 0)
    def _init():
        sum_acc[...] = jnp.zeros_like(sum_acc)
        max_acc[...] = jnp.full_like(max_acc, -jnp.inf)

    xf = x_ref[0].astype(jnp.float32)  # (C, tile), upcast on load

    # Sum path: tail was zero-padded in the wrapper -> zeros are neutral.
    sum_acc[...] += xf

    # Max path: mask padded lanes (only present in the last chunk) to -inf.
    if hw_true % tile != 0:
        lane = jax.lax.broadcasted_iota(jnp.int32, xf.shape, 1)
        valid = (h * tile + lane) < hw_true
        xm = jnp.where(valid, xf, -jnp.inf)
    else:
        xm = xf
    max_acc[...] = jnp.maximum(max_acc[...], xm)

    @pl.when(h == n_hw - 1)
    def _finalize():
        inv_hw = jnp.float32(1.0 / hw_true)
        avg = jnp.sum(sum_acc[...], axis=-1, keepdims=True) * inv_hw  # (C, 1)
        mx = jnp.max(max_acc[...], axis=-1, keepdims=True)            # (C, 1)

        w1 = w1_ref[...]  # (Cr, C)
        w2 = w2_ref[...]  # (C, Cr)

        # fc(avg): Conv1x1 (C->Cr) -> ReLU -> Conv1x1 (Cr->C), no bias.
        h_a = jnp.maximum(
            jnp.dot(w1, avg, preferred_element_type=jnp.float32), 0.0)
        a = jnp.dot(w2, h_a, preferred_element_type=jnp.float32)      # (C, 1)

        # fc(max): same shared weights.
        h_m = jnp.maximum(
            jnp.dot(w1, mx, preferred_element_type=jnp.float32), 0.0)
        m = jnp.dot(w2, h_m, preferred_element_type=jnp.float32)      # (C, 1)

        o_ref[0] = jax.nn.sigmoid(a + m)


def channel_attention(x, w1, w2, *, hw_tile=512, input_dtype=jnp.bfloat16):
    """x: (B, C, H, W); w1: (Cr, C) [fc1 1x1 conv]; w2: (C, Cr) [fc2 1x1 conv].

    Returns sigmoid(fc(avgpool(x)) + fc(maxpool(x))) with shape (B, C, 1, 1).
    """
    B, C, H, W = x.shape
    Cr = w1.shape[0]
    HW = H * W
    LANE = 128

    # Spatial tile: multiple of 128 lanes, at most hw_tile, at most the
    # (rounded-up) spatial extent.
    tile = max(LANE, min(hw_tile, pl.cdiv(HW, LANE) * LANE))
    tile = (tile // LANE) * LANE
    n_hw = pl.cdiv(HW, tile)
    HWp = n_hw * tile

    x_flat = x.reshape(B, C, HW).astype(input_dtype)
    if HWp != HW:
        # Zero padding: neutral for the sum; masked to -inf for the max.
        x_flat = jnp.pad(x_flat, ((0, 0), (0, 0), (0, HWp - HW)))

    kernel = functools.partial(channel_attention_kernel, hw_true=HW, tile=tile)

    # Explicit VMEM budget: 2x double-buffered x chunks + 2 f32 accumulators
    # + weights/output + headroom.  Capped well below v7x's 64 MiB physical.
    block_bytes = C * tile * jnp.dtype(input_dtype).itemsize
    acc_bytes = 2 * C * tile * 4
    vmem_limit_bytes = int(
        min(48 * 1024 * 1024,
            max(8 * 1024 * 1024, 4 * block_bytes + acc_bytes + (1 << 20))))

    out = pl.pallas_call(
        kernel,
        out_shape=jax.ShapeDtypeStruct((B, C, 1), jnp.float32),
        grid_spec=pltpu.PrefetchScalarGridSpec(
            num_scalar_prefetch=0,
            grid=(B, n_hw),  # batch (parallel across cores), spatial (reduction, last)
            in_specs=[
                pl.BlockSpec((1, C, tile), lambda b, h: (b, 0, h)),
                pl.BlockSpec((Cr, C), lambda b, h: (0, 0)),
                pl.BlockSpec((C, Cr), lambda b, h: (0, 0)),
            ],
            out_specs=pl.BlockSpec((1, C, 1), lambda b, h: (b, 0, 0)),
            scratch_shapes=[
                pltpu.VMEM((C, tile), jnp.float32),  # sum accumulator
                pltpu.VMEM((C, tile), jnp.float32),  # max accumulator
            ],
        ),
        compiler_params=pltpu.CompilerParams(
            dimension_semantics=("parallel", "arbitrary"),
            vmem_limit_bytes=vmem_limit_bytes,
        ),
    )(x_flat, w1, w2)

    return out.reshape(B, C, 1, 1)


def reference(x, w1, w2, input_dtype=jnp.float32):
    # Pure-JAX reference of the PyTorch forward (optionally with the same
    # bf16 input rounding the kernel uses), for a sanity check.
    xr = x.astype(input_dtype).astype(jnp.float32)
    avg = jnp.mean(xr, axis=(2, 3))                     # (B, C)
    mx = jnp.max(xr, axis=(2, 3))                       # (B, C)
    a = jnp.maximum(avg @ w1.T, 0.0) @ w2.T
    m = jnp.maximum(mx @ w1.T, 0.0) @ w2.T
    return jax.nn.sigmoid(a + m)[:, :, None, None]


if __name__ == "__main__":
    key = jax.random.PRNGKey(0)
    k_x, k_w1, k_w2 = jax.random.split(key, 3)

    reduction = 16
    # (B, C, H, W): first config matches the module's toy shape; the second
    # exercises the multi-chunk streaming path and the tail masking
    # (24*24 = 576 spatial -> two 512-lane chunks, 448 padded lanes).
    configs = [(2, 32, 16, 16), (2, 32, 24, 24)]

    for (B, C, H, W) in configs:
        Cr = C // reduction
        x = jax.random.normal(k_x, (B, C, H, W), dtype=jnp.float32)
        # fc1: Conv2d(C, Cr, 1, bias=False) -> weight (Cr, C)
        # fc2: Conv2d(Cr, C, 1, bias=False) -> weight (C, Cr)
        w1 = jax.random.normal(k_w1, (Cr, C), dtype=jnp.float32) * 0.1
        w2 = jax.random.normal(k_w2, (C, Cr), dtype=jnp.float32) * 0.1

        for dt in (jnp.bfloat16, jnp.float32):
            out = channel_attention(x, w1, w2, input_dtype=dt)
            out = jax.block_until_ready(out)
            ref = reference(x, w1, w2, input_dtype=dt)
            assert out.shape == (B, C, 1, 1)
            assert jnp.allclose(out, ref, atol=5e-5, rtol=5e-5), (
                f"mismatch vs reference for shape {(B, C, H, W)} dtype {dt}")

    print("KERNEL_OK")
</pallas_src>

<mosaic_0001>
module attributes {stable_mosaic.version = 11 : i64} {
  func.func @channel_attention_kernel(%arg0: i32, %arg1: i32, %arg2: memref<1x32x256xbf16, #tpu.memory_space<vmem>>, %arg3: memref<2x32xf32, #tpu.memory_space<vmem>>, %arg4: memref<32x2xf32, #tpu.memory_space<vmem>>, %arg5: memref<1x32x1xf32, #tpu.memory_space<vmem>>, %arg6: memref<32x256xf32, #tpu.memory_space<vmem>>, %arg7: memref<32x256xf32, #tpu.memory_space<vmem>>) attributes {dimension_semantics = [#tpu.dimension_semantics<parallel>, #tpu.dimension_semantics<arbitrary>], iteration_bounds = array<i64: 2, 1>, scalar_prefetch = 0 : i64, scratch_operands = 2 : i64, tpu.core_type = #tpu.core_type<tc>, window_params = [{transform_indices = @transform_0, window_bounds = array<i64: 1, 32, 256>}, {pipeline_mode = #tpu.pipeline_mode<synchronous>, transform_indices = @transform_1, window_bounds = array<i64: 2, 32>}, {pipeline_mode = #tpu.pipeline_mode<synchronous>, transform_indices = @transform_2, window_bounds = array<i64: 32, 2>}, {transform_indices = @transform_3, window_bounds = array<i64: 1, 32, 1>}]} {
    %c0_i32 = arith.constant 0 : i32
    %0 = arith.cmpi eq, %arg1, %c0_i32 : i32
    %1 = arith.extui %0 : i1 to i32
    %c0_i32_0 = arith.constant 0 : i32
    %2 = arith.cmpi ne, %1, %c0_i32_0 : i32
    scf.if %2 {
      %cst = arith.constant 0.000000e+00 : f32
      %15 = vector.broadcast %cst : f32 to vector<32x256xf32>
      %c0_13 = arith.constant 0 : index
      %c0_14 = arith.constant 0 : index
      %16 = vector.load %arg6[%c0_13, %c0_14] : memref<32x256xf32, #tpu.memory_space<vmem>>, vector<32x256xf32>
      tpu.vector_store %arg6[%c0_13, %c0_14], %15 {strides = array<i32>} : memref<32x256xf32, #tpu.memory_space<vmem>>, vector<32x256xf32>,
      %cst_15 = arith.constant 0xFF800000 : f32
      %17 = vector.broadcast %cst_15 : f32 to vector<32x256xf32>
      %c0_16 = arith.constant 0 : index
      %c0_17 = arith.constant 0 : index
      %18 = vector.load %arg7[%c0_16, %c0_17] : memref<32x256xf32, #tpu.memory_space<vmem>>, vector<32x256xf32>
      tpu.vector_store %arg7[%c0_16, %c0_17], %17 {strides = array<i32>} : memref<32x256xf32, #tpu.memory_space<vmem>>, vector<32x256xf32>,
    } else {
    }
    %c0 = arith.constant 0 : index
    %c0_1 = arith.constant 0 : index
    %c0_2 = arith.constant 0 : index
    %3 = vector.load %arg2[%c0, %c0_1, %c0_2] : memref<1x32x256xbf16, #tpu.memory_space<vmem>>, vector<1x32x256xbf16>
    %4 = vector.shape_cast %3 : vector<1x32x256xbf16> to vector<32x256xbf16>
    %5 = arith.extf %4 : vector<32x256xbf16> to vector<32x256xf32>
    %c0_3 = arith.constant 0 : index
    %c0_4 = arith.constant 0 : index
    %6 = vector.load %arg6[%c0_3, %c0_4] : memref<32x256xf32, #tpu.memory_space<vmem>>, vector<32x256xf32>
    %7 = arith.addf %6, %5 : vector<32x256xf32>
    %c0_5 = arith.constant 0 : index
    %c0_6 = arith.constant 0 : index
    %8 = vector.load %arg6[%c0_5, %c0_6] : memref<32x256xf32, #tpu.memory_space<vmem>>, vector<32x256xf32>
    tpu.vector_store %arg6[%c0_5, %c0_6], %7 {strides = array<i32>} : memref<32x256xf32, #tpu.memory_space<vmem>>, vector<32x256xf32>,
    %c0_7 = arith.constant 0 : index
    %c0_8 = arith.constant 0 : index
    %9 = vector.load %arg7[%c0_7, %c0_8] : memref<32x256xf32, #tpu.memory_space<vmem>>, vector<32x256xf32>
    %10 = arith.maximumf %9, %5 : vector<32x256xf32>
    %c0_9 = arith.constant 0 : index
    %c0_10 = arith.constant 0 : index
    %11 = vector.load %arg7[%c0_9, %c0_10] : memref<32x256xf32, #tpu.memory_space<vmem>>, vector<32x256xf32>
    tpu.vector_store %arg7[%c0_9, %c0_10], %10 {strides = array<i32>} : memref<32x256xf32, #tpu.memory_space<vmem>>, vector<32x256xf32>,
    %c0_i32_11 = arith.constant 0 : i32
    %12 = arith.cmpi eq, %arg1, %c0_i32_11 : i32
    %13 = arith.extui %12 : i1 to i32
    %c0_i32_12 = arith.constant 0 : i32
    %14 = arith.cmpi ne, %13, %c0_i32_12 : i32
    scf.if %14 {
      %c0_13 = arith.constant 0 : index
      %c0_14 = arith.constant 0 : index
      %15 = vector.load %arg6[%c0_13, %c0_14] : memref<32x256xf32, #tpu.memory_space<vmem>>, vector<32x256xf32>
      %cst = arith.constant dense<0.000000e+00> : vector<32xf32>
      %16 = vector.multi_reduction <add>, %15, %cst [1] : vector<32x256xf32> to vector<32xf32>
      %17 = vector.shape_cast %16 : vector<32xf32> to vector<32x1xf32>
      %cst_15 = arith.constant 3.906250e-03 : f32
      %18 = vector.broadcast %cst_15 : f32 to vector<32x1xf32>
      %19 = arith.mulf %17, %18 : vector<32x1xf32>
      %c0_16 = arith.constant 0 : index
      %c0_17 = arith.constant 0 : index
      %20 = vector.load %arg7[%c0_16, %c0_17] : memref<32x256xf32, #tpu.memory_space<vmem>>, vector<32x256xf32>
      %cst_18 = arith.constant dense<0xFF800000> : vector<32xf32>
      %21 = vector.multi_reduction <maximumf>, %20, %cst_18 [1] : vector<32x256xf32> to vector<32xf32>
      %22 = vector.shape_cast %21 : vector<32xf32> to vector<32x1xf32>
      %c0_19 = arith.constant 0 : index
      %c0_20 = arith.constant 0 : index
      %23 = vector.load %arg3[%c0_19, %c0_20] : memref<2x32xf32, #tpu.memory_space<vmem>>, vector<2x32xf32>
      %c0_21 = arith.constant 0 : index
      %c0_22 = arith.constant 0 : index
      %24 = vector.load %arg4[%c0_21, %c0_22] : memref<32x2xf32, #tpu.memory_space<vmem>>, vector<32x2xf32>
      %cst_23 = arith.constant dense<0.000000e+00> : vector<2x1xf32>
      %25 = tpu.matmul %23, %19, %cst_23 {dimension_numbers = #tpu.dot_dimension_numbers<[1], [0], [0], [1], [0, 0, 1, 1], [], []>} : vector<2x32xf32>, vector<32x1xf32>, vector<2x1xf32> -> vector<2x1xf32>
      %cst_24 = arith.constant 0.000000e+00 : f32
      %26 = vector.broadcast %cst_24 : f32 to vector<2x1xf32>
      %27 = arith.maximumf %25, %26 : vector<2x1xf32>
      %cst_25 = arith.constant dense<0.000000e+00> : vector<32x1xf32>
      %28 = tpu.matmul %24, %27, %cst_25 {dimension_numbers = #tpu.dot_dimension_numbers<[1], [0], [0], [1], [0, 0, 1, 1], [], []>} : vector<32x2xf32>, vector<2x1xf32>, vector<32x1xf32> -> vector<32x1xf32>
      %cst_26 = arith.constant dense<0.000000e+00> : vector<2x1xf32>
      %29 = tpu.matmul %23, %22, %cst_26 {dimension_numbers = #tpu.dot_dimension_numbers<[1], [0], [0], [1], [0, 0, 1, 1], [], []>} : vector<2x32xf32>, vector<32x1xf32>, vector<2x1xf32> -> vector<2x1xf32>
      %cst_27 = arith.constant 0.000000e+00 : f32
      %30 = vector.broadcast %cst_27 : f32 to vector<2x1xf32>
      %31 = arith.maximumf %29, %30 : vector<2x1xf32>
      %cst_28 = arith.constant dense<0.000000e+00> : vector<32x1xf32>
      %32 = tpu.matmul %24, %31, %cst_28 {dimension_numbers = #tpu.dot_dimension_numbers<[1], [0], [0], [1], [0, 0, 1, 1], [], []>} : vector<32x2xf32>, vector<2x1xf32>, vector<32x1xf32> -> vector<32x1xf32>
      %33 = arith.addf %28, %32 : vector<32x1xf32>
      %34 = arith.negf %33 : vector<32x1xf32>
      %35 = math.exp %34 : vector<32x1xf32>
      %cst_29 = arith.constant 1.000000e+00 : f32
      %36 = vector.broadcast %cst_29 : f32 to vector<32x1xf32>
      %37 = arith.addf %36, %35 : vector<32x1xf32>
      %38 = arith.divf %36, %37 : vector<32x1xf32>
      %c0_30 = arith.constant 0 : index
      %c0_31 = arith.constant 0 : index
      %c0_32 = arith.constant 0 : index
      %39 = vector.load %arg5[%c0_30, %c0_31, %c0_32] : memref<1x32x1xf32, #tpu.memory_space<vmem>>, vector<1x32x1xf32>
      %40 = vector.shape_cast %39 : vector<1x32x1xf32> to vector<32x1xf32>
      %41 = vector.shape_cast %38 : vector<32x1xf32> to vector<1x32x1xf32>
      tpu.vector_store %arg5[%c0_30, %c0_31, %c0_32], %41 {strides = array<i32>} : memref<1x32x1xf32, #tpu.memory_space<vmem>>, vector<1x32x1xf32>,
    } else {
    }
    return
  }
  func.func @transform_0(%arg0: i32, %arg1: i32) -> (i32, i32, i32) {
    %c0_i32 = arith.constant 0 : i32
    %c0_i32_0 = arith.constant 0 : i32
    return %arg0, %c0_i32, %arg1 : i32, i32, i32
  }
  func.func @transform_1(%arg0: i32, %arg1: i32) -> (i32, i32) {
    %c0_i32 = arith.constant 0 : i32
    %c0_i32_0 = arith.constant 0 : i32
    %c0_i32_1 = arith.constant 0 : i32
    return %c0_i32, %c0_i32_0 : i32, i32
  }
  func.func @transform_2(%arg0: i32, %arg1: i32) -> (i32, i32) {
    %c0_i32 = arith.constant 0 : i32
    %c0_i32_0 = arith.constant 0 : i32
    %c0_i32_1 = arith.constant 0 : i32
    return %c0_i32, %c0_i32_0 : i32, i32
  }
  func.func @transform_3(%arg0: i32, %arg1: i32) -> (i32, i32, i32) {
    %c0_i32 = arith.constant 0 : i32
    %c0_i32_0 = arith.constant 0 : i32
    %c0_i32_1 = arith.constant 0 : i32
    return %arg0, %c0_i32, %c0_i32_0 : i32, i32, i32
  }
}

</mosaic_0001>

<llo_original>
// kernel: tpu_custom_call.1
$region0: #{tpu_custom_call.1}
  #allocation0 [shape = 'u32[]', space=smem, size = 0x4, offset = 0x4, fixed_abs, tag = 'smem constant byte address 0x4 - core index']
  #allocation1 [shape = 'u32[144,128]{1,0:T(1,128)}', space=vmem, size = 0x12000, scoped, tag = 'internal scratch']
  #allocation2 [shape = 'f32[32,256]{1,0:T(8,128)}', space=vmem, size = 0x8000, scoped, tag = 'scratch operand']
  #allocation3 [shape = 'f32[32,256]{1,0:T(8,128)}', space=vmem, size = 0x8000, scoped, tag = 'scratch operand']
  %s0 = inlined_call_operand.hbm [shape: bf16[2,32,256], index: 0, kind: input, shape index: {}]
  %s1 = inlined_call_operand.vmem [shape: f32[2,32], index: 1, kind: input, shape index: {}]
  %s2 = inlined_call_operand.vmem [shape: f32[32,2], index: 2, kind: input, shape index: {}]
  %s3 = inlined_call_operand.vmem [shape: f32[2,32,1], index: 3, kind: output, shape index: {}]
  %s4 = sld [smem:[#allocation0]]
  $region57: #{tpu_custom_call.1} parent=0
    _
  %s6 = ssub.s32 1, %s4
  %s7 = scalar_select 0, %s6, %s4
  $region1: #{tpu_custom_call.1} parent=0
    #allocation4 [shape = 'u8[32768]{0}', space=vmem, size = 0x8000, scoped, tag = 'input window, operand 0']
    #allocation5 [shape = 's32[2]{0}', space=sflag, size = 0x8, scoped, tag = 'scoped memory for tpu_custom_call.1']
    %8 = vsyncpa [#allocation5], 0
    %s9 = scalar_lea.sflag [#allocation5], 1
    %10 = vsyncpa %s9, 0
    loop: start=0, step=1, limit=4
    $region2: #{tpu_custom_call.1} parent=1 // loop_pre_header
      _
    $region3: #{tpu_custom_call.1} parent=1 // loop_header
      %s12 = sphi 0, %s16
      %p13 = scmp.ge.s32.totalorder %s12, 4
      %s19 = sphi 0, %s31
      %s20 = sphi 0, %s27
      %s21 = sphi 0, %s19
      %s22 = sphi 0, %s20
      %s23 = sphi 0, %s21
      %s24 = sphi 0, %s22
      %s36 = sphi 0, %s38
      %s39 = sphi 0, %s36
      %s40 = sphi 0, %s39
      %s56 = sphi 0, %s40
      %s60 = sphi 0, %s60
      %s62 = sphi 0, %s60
      %s63 = sphi 0, %s62
      %s77 = sphi 0, %s63
      %s81 = sphi 0, %s81
      %s83 = sphi 0, %s81
      %s84 = sphi 0, %s83
      %s98 = sphi 0, %s84
      %s104 = sphi 0, %s106
      %s107 = sphi 0, %s104
      %s108 = sphi 0, %s107
      %s124 = sphi 0, %s108
    $region4: #{tpu_custom_call.1} parent=1 // loop_header_branch
      %15 = sbr.rel (%p13) target = $region8
    $region5: #{tpu_custom_call.1} parent=1 // loop_body
      %s17 = ssub.s32 %s12, 1
      %s18 = ssub.s32 %s12, 2
      %s25 = sadd.s32 1, %s20
      %p26 = scmp.ge.s32.totalorder %s25, 1
      %s27 = scalar_select %p26, 0, %s25
      %s28 = sadd.s32 1, %s19
      %s29 = scalar_select %p26, %s28, %s19
      %p30 = scmp.ge.s32.totalorder %s29, 2
      %s31 = scalar_select %p30, 0, %s29
      %s32 = ssub.s32 %s19, %s31
      %s33 = ssub.s32 %s20, %s27
      %s34 = sor.u32 %s32, %s33
      %p35 = scmp.eq.s32.totalorder %s34, 0
      %s37 = sadd.s32 %s36, 1
      %s38 = scalar_select %p35, %s36, %s37
      %p41 = pneg %p35
      %p42 = scmp.eq.s32.totalorder %s12, 1
      %p43 = por %p41, %p42
      %p44 = scmp.ne.s32.totalorder %s36, %s39
      %p45 = scmp.eq.s32.totalorder %s12, 0
      %p46 = por %p44, %p45
      %p47 = scmp.ne.s32.totalorder %s36, %s39
      %p48 = scmp.eq.s32.totalorder %s17, 1
      %p49 = por %p47, %p48
      %p50 = scmp.ne.s32.totalorder %s39, %s40
      %p51 = scmp.eq.s32.totalorder %s17, 0
      %p52 = por %p50, %p51
      %p53 = scmp.ne.s32.totalorder %s39, %s40
      %p54 = scmp.eq.s32.totalorder %s18, 1
      %p55 = por %p53, %p54
      %p57 = scmp.ne.s32.totalorder %s40, %s56
      %p58 = scmp.eq.s32.totalorder %s18, 0
      %p59 = por %p57, %p58
      %s61 = sadd.s32 %s60, 1
      %p64 = scmp.eq.s32.totalorder %s12, 1
      %p65 = scmp.ne.s32.totalorder %s60, %s62
      %p66 = scmp.eq.s32.totalorder %s12, 0
      %p67 = por %p65, %p66
      %p68 = scmp.ne.s32.totalorder %s60, %s62
      %p69 = scmp.eq.s32.totalorder %s17, 1
      %p70 = por %p68, %p69
      %p71 = scmp.ne.s32.totalorder %s62, %s63
      %p72 = scmp.eq.s32.totalorder %s17, 0
      %p73 = por %p71, %p72
      %p74 = scmp.ne.s32.totalorder %s62, %s63
      %p75 = scmp.eq.s32.totalorder %s18, 1
      %p76 = por %p74, %p75
      %p78 = scmp.ne.s32.totalorder %s63, %s77
      %p79 = scmp.eq.s32.totalorder %s18, 0
      %p80 = por %p78, %p79
      %s82 = sadd.s32 %s81, 1
      %p85 = scmp.eq.s32.totalorder %s12, 1
      %p86 = scmp.ne.s32.totalorder %s81, %s83
      %p87 = scmp.eq.s32.totalorder %s12, 0
      %p88 = por %p86, %p87
      %p89 = scmp.ne.s32.totalorder %s81, %s83
      %p90 = scmp.eq.s32.totalorder %s17, 1
      %p91 = por %p89, %p90
      %p92 = scmp.ne.s32.totalorder %s83, %s84
      %p93 = scmp.eq.s32.totalorder %s17, 0
      %p94 = por %p92, %p93
      %p95 = scmp.ne.s32.totalorder %s83, %s84
      %p96 = scmp.eq.s32.totalorder %s18, 1
      %p97 = por %p95, %p96
      %p99 = scmp.ne.s32.totalorder %s84, %s98
      %p100 = scmp.eq.s32.totalorder %s18, 0
      %p101 = por %p99, %p100
      %s102 = ssub.s32 %s19, %s31
      %p103 = scmp.eq.s32.totalorder %s102, 0
      %s105 = sadd.s32 %s104, 1
      %s106 = scalar_select %p103, %s104, %s105
      %p109 = pneg %p103
      %p110 = scmp.eq.s32.totalorder %s12, 1
      %p111 = por %p109, %p110
      %p112 = scmp.ne.s32.totalorder %s104, %s107
      %p113 = scmp.eq.s32.totalorder %s12, 0
      %p114 = por %p112, %p113
      %p115 = scmp.ne.s32.totalorder %s104, %s107
      %p116 = scmp.eq.s32.totalorder %s17, 1
      %p117 = por %p115, %p116
      %p118 = scmp.ne.s32.totalorder %s107, %s108
      %p119 = scmp.eq.s32.totalorder %s17, 0
      %p120 = por %p118, %p119
      %p121 = scmp.ne.s32.totalorder %s107, %s108
      %p122 = scmp.eq.s32.totalorder %s18, 1
      %p123 = por %p121, %p122
      %p125 = scmp.ne.s32.totalorder %s108, %s124
      %p126 = scmp.eq.s32.totalorder %s18, 0
      %p127 = por %p125, %p126
      %p128 = scmp.le.s32.totalorder 1, %s12
      %p129 = scmp.lt.s32.totalorder %s12, 3
      %p130 = pnand %p128, %p129
      %p131 = pneg %p130
      // Predicated region
      $region9: #{tpu_custom_call.1} parent=5 // pred_check
        _
      $region10: #{tpu_custom_call.1} parent=5 // pred_check_branch
        %133 = sbr.rel (%p130) target = $region12
      $region11: #{tpu_custom_call.1} parent=5 // pred_region
        %s134 = ssub.s32 %s12, 1
        // Predicated region
        $region13: #{tpu_custom_call.1} parent=11 // pred_check
          %p135 = pneg %p73
        $region14: #{tpu_custom_call.1} parent=11 // pred_check_branch
          %137 = sbr.rel (%p135) target = $region16
        $region15: #{tpu_custom_call.1} parent=11 // pred_region
          _
        $region16: #{tpu_custom_call.1} parent=11 // pred_fallthru
          _
        // Predicated region
        $region17: #{tpu_custom_call.1} parent=11 // pred_check
          %p138 = pneg %p94
        $region18: #{tpu_custom_call.1} parent=11 // pred_check_branch
          %140 = sbr.rel (%p138) target = $region20
        $region19: #{tpu_custom_call.1} parent=11 // pred_region
          _
        $region20: #{tpu_custom_call.1} parent=11 // pred_fallthru
          _
      $region12: #{tpu_custom_call.1} parent=5 // pred_fallthru
        _
      %p141 = scmp.lt.s32.totalorder %s12, 2
      // Predicated region
      $region21: #{tpu_custom_call.1} parent=5 // pred_check
        %p142 = pneg %p141
      $region22: #{tpu_custom_call.1} parent=5 // pred_check_branch
        %144 = sbr.rel (%p142) target = $region24
      $region23: #{tpu_custom_call.1} parent=5 // pred_region
        // Predicated region
        $region25: #{tpu_custom_call.1} parent=23 // pred_check
          %p145 = pneg %p46
        $region26: #{tpu_custom_call.1} parent=23 // pred_check_branch
          %147 = sbr.rel (%p145) target = $region28
        $region27: #{tpu_custom_call.1} parent=23 // pred_region
          %s148 = sand.u32 %s36, 1
          %s149 = scalar_lea.sflag [#allocation5], %s148
          %s150 = sand.u32 %s36, 1
          %s151 = smul.addr %s150, 32
          %s152 = scalar_lea.vmem [#allocation4], %s151
          %s153 = smul.u32 2, %s20
          %s155 = ssub.s32 512, 512
          %156 = vsyncadd %s149, %s155
          %s157 = smul.addr %s19, 8
          %s158 = sadd.s32 %s153, %s157
          %s159 = smul.addr %s158, 64
          %s160 = scalar_lea.hbm %s0, %s159
          %s161 = sshll.u32 %s152, 4
          %s162 = int_to_ptr.vmem [resolvable:$true] %s161
          %167 = dma.hbm_to_vmem [thread:$0]  %s160, 512, %s162, %s149, 128, 128, 8
        $region28: #{tpu_custom_call.1} parent=23 // pred_fallthru
          _
      $region24: #{tpu_custom_call.1} parent=5 // pred_fallthru
        _
      %p168 = scmp.le.s32.totalorder 1, %s12
      %p169 = scmp.lt.s32.totalorder %s12, 3
      %p170 = pnand %p168, %p169
      %p171 = pneg %p170
      // Predicated region
      $region29: #{tpu_custom_call.1} parent=5 // pred_check
        _
      $region30: #{tpu_custom_call.1} parent=5 // pred_check_branch
        %173 = sbr.rel (%p170) target = $region32
      $region31: #{tpu_custom_call.1} parent=5 // pred_region
        %s174 = ssub.s32 %s12, 1
        %s175 = sand.u32 %s39, 1
        %s176 = scalar_lea.sflag [#allocation5], %s175
        %s177 = sand.u32 %s39, 1
        %s178 = smul.addr %s177, 32
        %s179 = scalar_lea.vmem [#allocation4], %s178
        // Predicated region
        $region33: #{tpu_custom_call.1} parent=31 // pred_check
          %p180 = pneg %p52
        $region34: #{tpu_custom_call.1} parent=31 // pred_check_branch
          %182 = sbr.rel (%p180) target = $region36
        $region35: #{tpu_custom_call.1} parent=31 // pred_region
          %183 = dma.done %s176, 512
        $region36: #{tpu_custom_call.1} parent=31 // pred_fallthru
          _
        %s184 = sand.u32 %s39, 1
        %s185 = scalar_lea.sflag [#allocation5], %s184
        %s186 = sand.u32 %s39, 1
        %s187 = smul.addr %s186, 32
        %s188 = scalar_lea.vmem [#allocation4], %s187
        %p189 = pneg %p52
        %p190 = pneg %p49
        %p191 = pneg %p73
        %p192 = pneg %p70
        %p193 = pneg %p94
        %p194 = pneg %p91
        %p195 = pneg %p120
        %p196 = pneg %p117
        %p197 = scmp.lt.s32.totalorder %s21, 1
        %s198 = scalar_select %p197, %s21, 1
        %s199 = smul.addr %s198, 4
        %s200 = smul.addr %s199, 8
        %s201 = scalar_lea.vmem %s3, %s200
        %s202 = smul.u32 2, %s22
        %p203 = scmp.lt.s32.totalorder %s21, 1
        %s204 = scalar_select %p203, %s21, 1
        %s205 = smul.addr %s204, 4
        %s206 = smul.addr %s205, 8
        %s207 = scalar_lea.vmem %s3, %s206
        %p208 = scmp.eq.s32.totalorder %s22, 0
        // Predicated region
        $region37: #{tpu_custom_call.1} parent=31 // pred_check
          %p209 = pneg %p208
        $region38: #{tpu_custom_call.1} parent=31 // pred_check_branch
          %211 = sbr.rel (%p209) target = $region40
        $region39: #{tpu_custom_call.1} parent=31 // pred_region
          %212 = vst [vmem:[#allocation2] sm:$0xff] 0.0
          %213 = vst [vmem:[#allocation2 + $0x8] sm:$0xff] 0.0
          %214 = vst [vmem:[#allocation2 + $0x10] sm:$0xff] 0.0
          %215 = vst [vmem:[#allocation2 + $0x18] sm:$0xff] 0.0
          %216 = vst [vmem:[#allocation2 + $0x20] sm:$0xff] 0.0
          %217 = vst [vmem:[#allocation2 + $0x28] sm:$0xff] 0.0
          %218 = vst [vmem:[#allocation2 + $0x30] sm:$0xff] 0.0
          %219 = vst [vmem:[#allocation2 + $0x38] sm:$0xff] 0.0
          %220 = vst [vmem:[#allocation3] sm:$0xff] -inf
          %221 = vst [vmem:[#allocation3 + $0x8] sm:$0xff] -inf
          %222 = vst [vmem:[#allocation3 + $0x10] sm:$0xff] -inf
          %223 = vst [vmem:[#allocation3 + $0x18] sm:$0xff] -inf
          %224 = vst [vmem:[#allocation3 + $0x20] sm:$0xff] -inf
          %225 = vst [vmem:[#allocation3 + $0x28] sm:$0xff] -inf
          %226 = vst [vmem:[#allocation3 + $0x30] sm:$0xff] -inf
          %227 = vst [vmem:[#allocation3 + $0x38] sm:$0xff] -inf
        $region40: #{tpu_custom_call.1} parent=31 // pred_fallthru
          _
        %v228 = vld [vmem:[%s179] sm:$0xff]
        %v229 = vld [vmem:[%s179 + $0x8] sm:$0xff]
        %v230 = vld [vmem:[%s179 + $0x10] sm:$0xff]
        %v231 = vld [vmem:[%s179 + $0x18] sm:$0xff]
        %v232 = vunpack.c.l.bf16 %v228
        %v233 = vunpack.c.h.bf16 %v228
        %v234 = vunpack.c.l.bf16 %v229
        %v235 = vunpack.c.h.bf16 %v229
        %v236 = vunpack.c.l.bf16 %v230
        %v237 = vunpack.c.h.bf16 %v230
        %v238 = vunpack.c.l.bf16 %v231
        %v239 = vunpack.c.h.bf16 %v231
        %v240 = vld [vmem:[#allocation2] sm:$0xff]
        %v241 = vld [vmem:[#allocation2 + $0x8] sm:$0xff]
        %v242 = vld [vmem:[#allocation2 + $0x10] sm:$0xff]
        %v243 = vld [vmem:[#allocation2 + $0x18] sm:$0xff]
        %v244 = vld [vmem:[#allocation2 + $0x20] sm:$0xff]
        %v245 = vld [vmem:[#allocation2 + $0x28] sm:$0xff]
        %v246 = vld [vmem:[#allocation2 + $0x30] sm:$0xff]
        %v247 = vld [vmem:[#allocation2 + $0x38] sm:$0xff]
        %v248 = vadd.f32 %v240, %v232
        %v249 = vadd.f32 %v241, %v233
        %v250 = vadd.f32 %v242, %v234
        %v251 = vadd.f32 %v243, %v235
        %v252 = vadd.f32 %v244, %v236
        %v253 = vadd.f32 %v245, %v237
        %v254 = vadd.f32 %v246, %v238
        %v255 = vadd.f32 %v247, %v239
        %256 = vst [vmem:[#allocation2] sm:$0xff] %v248
        %257 = vst [vmem:[#allocation2 + $0x8] sm:$0xff] %v249
        %258 = vst [vmem:[#allocation2 + $0x10] sm:$0xff] %v250
        %259 = vst [vmem:[#allocation2 + $0x18] sm:$0xff] %v251
        %260 = vst [vmem:[#allocation2 + $0x20] sm:$0xff] %v252
        %261 = vst [vmem:[#allocation2 + $0x28] sm:$0xff] %v253
        %262 = vst [vmem:[#allocation2 + $0x30] sm:$0xff] %v254
        %263 = vst [vmem:[#allocation2 + $0x38] sm:$0xff] %v255
        %v264 = vld [vmem:[#allocation3] sm:$0xff]
        %v265 = vld [vmem:[#allocation3 + $0x8] sm:$0xff]
        %v266 = vld [vmem:[#allocation3 + $0x10] sm:$0xff]
        %v267 = vld [vmem:[#allocation3 + $0x18] sm:$0xff]
        %v268 = vld [vmem:[#allocation3 + $0x20] sm:$0xff]
        %v269 = vld [vmem:[#allocation3 + $0x28] sm:$0xff]
        %v270 = vld [vmem:[#allocation3 + $0x30] sm:$0xff]
        %v271 = vld [vmem:[#allocation3 + $0x38] sm:$0xff]
        %v272 = vmax.f32 %v264, %v232
        %v273 = vmax.f32 %v265, %v233
        %v274 = vmax.f32 %v266, %v234
        %v275 = vmax.f32 %v267, %v235
        %v276 = vmax.f32 %v268, %v236
        %v277 = vmax.f32 %v269, %v237
        %v278 = vmax.f32 %v270, %v238
        %v279 = vmax.f32 %v271, %v239
        %280 = vst [vmem:[#allocation3] sm:$0xff] %v272
        %281 = vst [vmem:[#allocation3 + $0x8] sm:$0xff] %v273
        %282 = vst [vmem:[#allocation3 + $0x10] sm:$0xff] %v274
        %283 = vst [vmem:[#allocation3 + $0x18] sm:$0xff] %v275
        %284 = vst [vmem:[#allocation3 + $0x20] sm:$0xff] %v276
        %285 = vst [vmem:[#allocation3 + $0x28] sm:$0xff] %v277
        %286 = vst [vmem:[#allocation3 + $0x30] sm:$0xff] %v278
        %287 = vst [vmem:[#allocation3 + $0x38] sm:$0xff] %v279
        // Predicated region
        $region41: #{tpu_custom_call.1} parent=31 // pred_check
          %p288 = pneg %p208
        $region42: #{tpu_custom_call.1} parent=31 // pred_check_branch
          %290 = sbr.rel (%p288) target = $region44
        $region43: #{tpu_custom_call.1} parent=31 // pred_region
          %v291 = vld [vmem:[#allocation2] sm:$0xff]
          %v292 = vld [vmem:[#allocation2 + $0x8] sm:$0xff]
          %v293 = vld [vmem:[#allocation2 + $0x10] sm:$0xff]
          %v294 = vld [vmem:[#allocation2 + $0x18] sm:$0xff]
          %v295 = vld [vmem:[#allocation2 + $0x20] sm:$0xff]
          %v296 = vld [vmem:[#allocation2 + $0x28] sm:$0xff]
          %v297 = vld [vmem:[#allocation2 + $0x30] sm:$0xff]
          %v298 = vld [vmem:[#allocation2 + $0x38] sm:$0xff]
          %v299 = vadd.f32 %v291, %v292
          %300 = vadd.xlane.f32.xlu0 %v299
          %v301 = vpop.xlane.xlu0 %300
          %v302 = vadd.f32 %v293, %v294
          %303 = vadd.xlane.f32.xlu0 %v302
          %v304 = vpop.xlane.xlu0 %303
          %v305 = vadd.f32 %v295, %v296
          %306 = vadd.xlane.f32.xlu0 %v305
          %v307 = vpop.xlane.xlu0 %306
          %v308 = vadd.f32 %v297, %v298
          %309 = vadd.xlane.f32.xlu0 %v308
          %v310 = vpop.xlane.xlu0 %309
          %v311 = vmul.f32 %v301, 0.00390625
          %v312 = vmul.f32 %v304, 0.00390625
          %v313 = vmul.f32 %v307, 0.00390625
          %v314 = vmul.f32 %v310, 0.00390625
          %v315 = vld [vmem:[#allocation3] sm:$0xff]
          %v316 = vld [vmem:[#allocation3 + $0x8] sm:$0xff]
          %v317 = vld [vmem:[#allocation3 + $0x10] sm:$0xff]
          %v318 = vld [vmem:[#allocation3 + $0x18] sm:$0xff]
          %v319 = vld [vmem:[#allocation3 + $0x20] sm:$0xff]
          %v320 = vld [vmem:[#allocation3 + $0x28] sm:$0xff]
          %v321 = vld [vmem:[#allocation3 + $0x30] sm:$0xff]
          %v322 = vld [vmem:[#allocation3 + $0x38] sm:$0xff]
          %v323 = vmax.f32 %v315, %v316
          %324 = vmax.xlane.f32.xlu0 %v323
          %v325 = vpop.xlane.xlu0 %324
          %v326 = vmax.f32 %v317, %v318
          %327 = vmax.xlane.f32.xlu0 %v326
          %v328 = vpop.xlane.xlu0 %327
          %v329 = vmax.f32 %v319, %v320
          %330 = vmax.xlane.f32.xlu0 %v329
          %v331 = vpop.xlane.xlu0 %330
          %v332 = vmax.f32 %v321, %v322
          %333 = vmax.xlane.f32.xlu0 %v332
          %v334 = vpop.xlane.xlu0 %333
          %v335 = vld [vmem:[%s1] sm:$0x3]
          %v336 = vld [vmem:[%s2] sm:$0xff]
          %v337 = vld [vmem:[%s2 + $0x8] sm:$0xff]
          %v338 = vld [vmem:[%s2 + $0x10] sm:$0xff]
          %v339 = vld [vmem:[%s2 + $0x18] sm:$0xff]
          %vm340 = vcmask 261120
          %v342 = vsel %vm340, %v335, 0
          %344 = vmatprep.subr.mxu0 0.0
          %345 = vmatpush1.msra.mxu0 %v311
          %346 = vmatprep.subr.mxu0 0.0
          %347 = vmatpush1.msra.mxu0 %v312
          %348 = vmatprep.subr.mxu0 0.0
          %349 = vmatpush1.msra.mxu0 %v313
          %350 = vmatprep.subr.mxu0 0.0
          %351 = vmatpush1.msra.mxu0 %v314
          %352 = vmatprep.subr.mxu0 0.0
          %353 = vmatpush1.msra.mxu0 0.0
          %354 = vmatprep.subr.mxu0 0.0
          %355 = vmatpush1.msra.mxu0 0.0
          %356 = vmatprep.subr.mxu0 0.0
          %357 = vmatpush1.msra.mxu0 0.0
          %358 = vmatprep.subr.mxu0 0.0
          %359 = vmatpush1.msra.mxu0 0.0
          %360 = vmatprep.subr.mxu0 0.0
          %361 = vmatpush1.msra.mxu0 0.0
          %362 = vmatprep.subr.mxu0 0.0
          %363 = vmatpush1.msra.mxu0 0.0
          %364 = vmatprep.subr.mxu0 0.0
          %365 = vmatpush1.msra.mxu0 0.0
          %366 = vmatprep.subr.mxu0 0.0
          %367 = vmatpush1.msra.mxu0 0.0
          %368 = vmatprep.subr.mxu0 0.0
          %369 = vmatpush1.msra.mxu0 0.0
          %370 = vmatprep.subr.mxu0 0.0
          %371 = vmatpush1.msra.mxu0 0.0
          %372 = vmatprep.subr.mxu0 0.0
          %373 = vmatpush1.msra.mxu0 0.0
          %374 = vmatprep.subr.mxu0 0.0
          %375 = vmatpush1.msra.mxu0 0.0
          %376 = vmatprep.subr.mxu0 0.0
          %377 = vmatpush1.msra.mxu0 0.0
          %378 = vmatprep.subr.mxu0 0.0
          %379 = vmatpush1.msra.mxu0 0.0
          %380 = vmatprep.subr.mxu0 0.0
          %381 = vmatpush1.msra.mxu0 0.0
          %382 = vmatprep.subr.mxu0 0.0
          %383 = vmatpush1.msra.mxu0 0.0
          %384 = vmatprep.subr.mxu0 0.0
          %385 = vmatpush1.msra.mxu0 0.0
          %386 = vmatprep.subr.mxu0 0.0
          %387 = vmatpush1.msra.mxu0 0.0
          %388 = vmatprep.subr.mxu0 0.0
          %389 = vmatpush1.msra.mxu0 0.0
          %390 = vmatprep.subr.mxu0 0.0
          %391 = vmatpush1.msra.mxu0 0.0
          %392 = vmatprep.subr.mxu0 0.0
          %393 = vmatpush1.msra.mxu0 0.0
          %394 = vmatprep.subr.mxu0 0.0
          %395 = vmatpush1.msra.mxu0 0.0
          %396 = vmatprep.subr.mxu0 0.0
          %397 = vmatpush1.msra.mxu0 0.0
          %398 = vmatprep.subr.mxu0 0.0
          %399 = vmatpush1.msra.mxu0 0.0
          %400 = vmatprep.subr.mxu0 0.0
          %401 = vmatpush1.msra.mxu0 0.0
          %402 = vmatprep.subr.mxu0 0.0
          %403 = vmatpush1.msra.mxu0 0.0
          %404 = vmatprep.subr.mxu0 0.0
          %405 = vmatpush1.msra.mxu0 0.0
          %406 = vmatprep.subr.mxu0 0.0
          %407 = vmatpush1.msra.mxu0 0.0
          %408 = vmatprep.mubr.f32.mxu0 0.0
          %409 = vmatmul.mubr.f32.gmra.mrb[0].mxu0 %v342
          %v410 = vpop.f32.mrb[0].mxu0
          %v411 = vadd.f32 0.0, %v410
          %v412 = vpop.f32.mrb[0].mxu0
          %413 = vdwg.mxu0
          %v414 = vmax.f32 %v411, 0.0
          %415 = vmatprep.subr.mxu0 0.0
          %416 = vmatpush1.msra.mxu0 %v325
          %417 = vmatprep.subr.mxu0 0.0
          %418 = vmatpush1.msra.mxu0 %v328
          %419 = vmatprep.subr.mxu0 0.0
          %420 = vmatpush1.msra.mxu0 %v331
          %421 = vmatprep.subr.mxu0 0.0
          %422 = vmatpush1.msra.mxu0 %v334
          %423 = vmatprep.subr.mxu0 0.0
          %424 = vmatpush1.msra.mxu0 0.0
          %425 = vmatprep.subr.mxu0 0.0
          %426 = vmatpush1.msra.mxu0 0.0
          %427 = vmatprep.subr.mxu0 0.0
          %428 = vmatpush1.msra.mxu0 0.0
          %429 = vmatprep.subr.mxu0 0.0
          %430 = vmatpush1.msra.mxu0 0.0
          %431 = vmatprep.subr.mxu0 0.0
          %432 = vmatpush1.msra.mxu0 0.0
          %433 = vmatprep.subr.mxu0 0.0
          %434 = vmatpush1.msra.mxu0 0.0
          %435 = vmatprep.subr.mxu0 0.0
          %436 = vmatpush1.msra.mxu0 0.0
          %437 = vmatprep.subr.mxu0 0.0
          %438 = vmatpush1.msra.mxu0 0.0
          %439 = vmatprep.subr.mxu0 0.0
          %440 = vmatpush1.msra.mxu0 0.0
          %441 = vmatprep.subr.mxu0 0.0
          %442 = vmatpush1.msra.mxu0 0.0
          %443 = vmatprep.subr.mxu0 0.0
          %444 = vmatpush1.msra.mxu0 0.0
          %445 = vmatprep.subr.mxu0 0.0
          %446 = vmatpush1.msra.mxu0 0.0
          %447 = vmatprep.subr.mxu0 0.0
          %448 = vmatpush1.msra.mxu0 0.0
          %449 = vmatprep.subr.mxu0 0.0
          %450 = vmatpush1.msra.mxu0 0.0
          %451 = vmatprep.subr.mxu0 0.0
          %452 = vmatpush1.msra.mxu0 0.0
          %453 = vmatprep.subr.mxu0 0.0
          %454 = vmatpush1.msra.mxu0 0.0
          %455 = vmatprep.subr.mxu0 0.0
          %456 = vmatpush1.msra.mxu0 0.0
          %457 = vmatprep.subr.mxu0 0.0
          %458 = vmatpush1.msra.mxu0 0.0
          %459 = vmatprep.subr.mxu0 0.0
          %460 = vmatpush1.msra.mxu0 0.0
          %461 = vmatprep.subr.mxu0 0.0
          %462 = vmatpush1.msra.mxu0 0.0
          %463 = vmatprep.subr.mxu0 0.0
          %464 = vmatpush1.msra.mxu0 0.0
          %465 = vmatprep.subr.mxu0 0.0
          %466 = vmatpush1.msra.mxu0 0.0
          %467 = vmatprep.subr.mxu0 0.0
          %468 = vmatpush1.msra.mxu0 0.0
          %469 = vmatprep.subr.mxu0 0.0
          %470 = vmatpush1.msra.mxu0 0.0
          %471 = vmatprep.subr.mxu0 0.0
          %472 = vmatpush1.msra.mxu0 0.0
          %473 = vmatprep.subr.mxu0 0.0
          %474 = vmatpush1.msra.mxu0 0.0
          %475 = vmatprep.subr.mxu0 0.0
          %476 = vmatpush1.msra.mxu0 0.0
          %477 = vmatprep.subr.mxu0 0.0
          %478 = vmatpush1.msra.mxu0 0.0
          %479 = vmatprep.mubr.f32.mxu0 0.0
          %480 = vmatmul.mubr.f32.gmra.mrb[0].mxu0 %v342
          %v481 = vpop.f32.mrb[0].mxu0
          %v482 = vadd.f32 0.0, %v481
          %v483 = vpop.f32.mrb[0].mxu0
          %484 = vdwg.mxu0
          %v485 = vmax.f32 %v482, 0.0
          %vm486 = vcmask 15360
          %v488 = vsel %vm486, %v336, 0
          %v491 = vsel %vm486, %v337, 0
          %v494 = vsel %vm486, %v338, 0
          %v497 = vsel %vm486, %v339, 0
          %vm499 = vcmask 1041408
          %v501 = vsel %vm499, %v485, 0
          %503 = vmatprep.subr.mxu0 0.0
          %504 = vmatpush1.msra.mxu0 %v501
          %505 = vmatprep.subr.mxu0 0.0
          %506 = vmatpush1.msra.mxu0 0.0
          %507 = vmatprep.subr.mxu0 0.0
          %508 = vmatpush1.msra.mxu0 0.0
          %509 = vmatprep.subr.mxu0 0.0
          %510 = vmatpush1.msra.mxu0 0.0
          %511 = vmatprep.subr.mxu0 0.0
          %512 = vmatpush1.msra.mxu0 0.0
          %513 = vmatprep.subr.mxu0 0.0
          %514 = vmatpush1.msra.mxu0 0.0
          %515 = vmatprep.subr.mxu0 0.0
          %516 = vmatpush1.msra.mxu0 0.0
          %517 = vmatprep.subr.mxu0 0.0
          %518 = vmatpush1.msra.mxu0 0.0
          %519 = vmatprep.subr.mxu0 0.0
          %520 = vmatpush1.msra.mxu0 0.0
          %521 = vmatprep.subr.mxu0 0.0
          %522 = vmatpush1.msra.mxu0 0.0
          %523 = vmatprep.subr.mxu0 0.0
          %524 = vmatpush1.msra.mxu0 0.0
          %525 = vmatprep.subr.mxu0 0.0
          %526 = vmatpush1.msra.mxu0 0.0
          %527 = vmatprep.subr.mxu0 0.0
          %528 = vmatpush1.msra.mxu0 0.0
          %529 = vmatprep.subr.mxu0 0.0
          %530 = vmatpush1.msra.mxu0 0.0
          %531 = vmatprep.subr.mxu0 0.0
          %532 = vmatpush1.msra.mxu0 0.0
          %533 = vmatprep.subr.mxu0 0.0
          %534 = vmatpush1.msra.mxu0 0.0
          %535 = vmatprep.subr.mxu0 0.0
          %536 = vmatpush1.msra.mxu0 0.0
          %537 = vmatprep.subr.mxu0 0.0
          %538 = vmatpush1.msra.mxu0 0.0
          %539 = vmatprep.subr.mxu0 0.0
          %540 = vmatpush1.msra.mxu0 0.0
          %541 = vmatprep.subr.mxu0 0.0
          %542 = vmatpush1.msra.mxu0 0.0
          %543 = vmatprep.subr.mxu0 0.0
          %544 = vmatpush1.msra.mxu0 0.0
          %545 = vmatprep.subr.mxu0 0.0
          %546 = vmatpush1.msra.mxu0 0.0
          %547 = vmatprep.subr.mxu0 0.0
          %548 = vmatpush1.msra.mxu0 0.0
          %549 = vmatprep.subr.mxu0 0.0
          %550 = vmatpush1.msra.mxu0 0.0
          %551 = vmatprep.subr.mxu0 0.0
          %552 = vmatpush1.msra.mxu0 0.0
          %553 = vmatprep.subr.mxu0 0.0
          %554 = vmatpush1.msra.mxu0 0.0
          %555 = vmatprep.subr.mxu0 0.0
          %556 = vmatpush1.msra.mxu0 0.0
          %557 = vmatprep.subr.mxu0 0.0
          %558 = vmatpush1.msra.mxu0 0.0
          %559 = vmatprep.subr.mxu0 0.0
          %560 = vmatpush1.msra.mxu0 0.0
          %561 = vmatprep.subr.mxu0 0.0
          %562 = vmatpush1.msra.mxu0 0.0
          %563 = vmatprep.subr.mxu0 0.0
          %564 = vmatpush1.msra.mxu0 0.0
          %565 = vmatprep.subr.mxu0 0.0
          %566 = vmatpush1.msra.mxu0 0.0
          %567 = vmatprep.mubr.f32.mxu0 0.0
          %568 = vmatmul.mubr.f32.gmra.mrb[0].mxu0 %v488
          %v569 = vpop.f32.mrb[0].mxu0
          %v570 = vadd.f32 0.0, %v569
          %v571 = vpop.f32.mrb[0].mxu0
          %572 = vmatprep.mubr.f32.mxu0 0.0
          %573 = vmatmul.mubr.f32.gmra.mrb[0].mxu0 %v491
          %v574 = vpop.f32.mrb[0].mxu0
          %v575 = vadd.f32 0.0, %v574
          %v576 = vpop.f32.mrb[0].mxu0
          %577 = vmatprep.mubr.f32.mxu0 0.0
          %578 = vmatmul.mubr.f32.gmra.mrb[0].mxu0 %v494
          %v579 = vpop.f32.mrb[0].mxu0
          %v580 = vadd.f32 0.0, %v579
          %v581 = vpop.f32.mrb[0].mxu0
          %582 = vmatprep.mubr.f32.mxu0 0.0
          %583 = vmatmul.mubr.f32.gmra.mrb[0].mxu0 %v497
          %v584 = vpop.f32.mrb[0].mxu0
          %v585 = vadd.f32 0.0, %v584
          %v586 = vpop.f32.mrb[0].mxu0
          %587 = vdwg.mxu0
          %v589 = vsel %vm499, %v414, 0
          %591 = vmatprep.subr.mxu0 0.0
          %592 = vmatpush1.msra.mxu0 %v589
          %593 = vmatprep.subr.mxu0 0.0
          %594 = vmatpush1.msra.mxu0 0.0
          %595 = vmatprep.subr.mxu0 0.0
          %596 = vmatpush1.msra.mxu0 0.0
          %597 = vmatprep.subr.mxu0 0.0
          %598 = vmatpush1.msra.mxu0 0.0
          %599 = vmatprep.subr.mxu0 0.0
          %600 = vmatpush1.msra.mxu0 0.0
          %601 = vmatprep.subr.mxu0 0.0
          %602 = vmatpush1.msra.mxu0 0.0
          %603 = vmatprep.subr.mxu0 0.0
          %604 = vmatpush1.msra.mxu0 0.0
          %605 = vmatprep.subr.mxu0 0.0
          %606 = vmatpush1.msra.mxu0 0.0
          %607 = vmatprep.subr.mxu0 0.0
          %608 = vmatpush1.msra.mxu0 0.0
          %609 = vmatprep.subr.mxu0 0.0
          %610 = vmatpush1.msra.mxu0 0.0
          %611 = vmatprep.subr.mxu0 0.0
          %612 = vmatpush1.msra.mxu0 0.0
          %613 = vmatprep.subr.mxu0 0.0
          %614 = vmatpush1.msra.mxu0 0.0
          %615 = vmatprep.subr.mxu0 0.0
          %616 = vmatpush1.msra.mxu0 0.0
          %617 = vmatprep.subr.mxu0 0.0
          %618 = vmatpush1.msra.mxu0 0.0
          %619 = vmatprep.subr.mxu0 0.0
          %620 = vmatpush1.msra.mxu0 0.0
          %621 = vmatprep.subr.mxu0 0.0
          %622 = vmatpush1.msra.mxu0 0.0
          %623 = vmatprep.subr.mxu0 0.0
          %624 = vmatpush1.msra.mxu0 0.0
          %625 = vmatprep.subr.mxu0 0.0
          %626 = vmatpush1.msra.mxu0 0.0
          %627 = vmatprep.subr.mxu0 0.0
          %628 = vmatpush1.msra.mxu0 0.0
          %629 = vmatprep.subr.mxu0 0.0
          %630 = vmatpush1.msra.mxu0 0.0
          %631 = vmatprep.subr.mxu0 0.0
          %632 = vmatpush1.msra.mxu0 0.0
          %633 = vmatprep.subr.mxu0 0.0
          %634 = vmatpush1.msra.mxu0 0.0
          %635 = vmatprep.subr.mxu0 0.0
          %636 = vmatpush1.msra.mxu0 0.0
          %637 = vmatprep.subr.mxu0 0.0
          %638 = vmatpush1.msra.mxu0 0.0
          %639 = vmatprep.subr.mxu0 0.0
          %640 = vmatpush1.msra.mxu0 0.0
          %641 = vmatprep.subr.mxu0 0.0
          %642 = vmatpush1.msra.mxu0 0.0
          %643 = vmatprep.subr.mxu0 0.0
          %644 = vmatpush1.msra.mxu0 0.0
          %645 = vmatprep.subr.mxu0 0.0
          %646 = vmatpush1.msra.mxu0 0.0
          %647 = vmatprep.subr.mxu0 0.0
          %648 = vmatpush1.msra.mxu0 0.0
          %649 = vmatprep.subr.mxu0 0.0
          %650 = vmatpush1.msra.mxu0 0.0
          %651 = vmatprep.subr.mxu0 0.0
          %652 = vmatpush1.msra.mxu0 0.0
          %653 = vmatprep.subr.mxu0 0.0
          %654 = vmatpush1.msra.mxu0 0.0
          %655 = vmatprep.mubr.f32.mxu0 0.0
          %656 = vmatmul.mubr.f32.gmra.mrb[0].mxu0 %v488
          %v657 = vpop.f32.mrb[0].mxu0
          %v658 = vadd.f32 %v570, %v657
          %v659 = vpop.f32.mrb[0].mxu0
          %660 = vmatprep.mubr.f32.mxu0 0.0
          %661 = vmatmul.mubr.f32.gmra.mrb[0].mxu0 %v491
          %v662 = vpop.f32.mrb[0].mxu0
          %v663 = vadd.f32 %v575, %v662
          %v664 = vpop.f32.mrb[0].mxu0
          %665 = vmatprep.mubr.f32.mxu0 0.0
          %666 = vmatmul.mubr.f32.gmra.mrb[0].mxu0 %v494
          %v667 = vpop.f32.mrb[0].mxu0
          %v668 = vadd.f32 %v580, %v667
          %v669 = vpop.f32.mrb[0].mxu0
          %670 = vmatprep.mubr.f32.mxu0 0.0
          %671 = vmatmul.mubr.f32.gmra.mrb[0].mxu0 %v497
          %v672 = vpop.f32.mrb[0].mxu0
          %v673 = vadd.f32 %v585, %v672
          %v674 = vpop.f32.mrb[0].mxu0
          %675 = vdwg.mxu0
          %v676 = vxor.u32 %v658, 2147483648
          %v677 = vxor.u32 %v663, 2147483648
          %v678 = vxor.u32 %v668, 2147483648
          %v679 = vxor.u32 %v673, 2147483648
          %v680 = vmul.f32 %v676, 1.442695
          %v681 = vpow.pop %v680
          %v682 = vmul.f32 %v677, 1.442695
          %v683 = vpow.pop %v682
          %v684 = vmul.f32 %v678, 1.442695
          %v685 = vpow.pop %v684
          %v686 = vmul.f32 %v679, 1.442695
          %v687 = vpow.pop %v686
          %v688 = vadd.f32 %v681, 1.0
          %v689 = vadd.f32 %v683, 1.0
          %v690 = vadd.f32 %v685, 1.0
          %v691 = vadd.f32 %v687, 1.0
          %v692 = vrcp.pop %v688
          %v693 = vmul.f32 1.0, %v692
          %v694 = vrcp.pop %v689
          %v695 = vmul.f32 1.0, %v694
          %v696 = vrcp.pop %v690
          %v697 = vmul.f32 1.0, %v696
          %v698 = vrcp.pop %v691
          %v699 = vmul.f32 1.0, %v698
          %vm700 = vcmask 7168
          %701 = vst.msk [vmem:[%s207] sm:$0xff] %vm700, %v693
          %702 = vst.msk [vmem:[%s207 + $0x8] sm:$0xff] %vm700, %v695
          %703 = vst.msk [vmem:[%s207 + $0x10] sm:$0xff] %vm700, %v697
          %704 = vst.msk [vmem:[%s207 + $0x18] sm:$0xff] %vm700, %v699
        $region44: #{tpu_custom_call.1} parent=31 // pred_fallthru
          _
        %p705 = scmp.lt.s32.totalorder %s21, 1
        %s706 = scalar_select %p705, %s21, 1
        %s707 = smul.addr %s706, 4
        %s708 = smul.addr %s707, 8
        %s709 = scalar_lea.vmem %s3, %s708
        // Predicated region
        $region45: #{tpu_custom_call.1} parent=31 // pred_check
          %p710 = pneg %p117
        $region46: #{tpu_custom_call.1} parent=31 // pred_check_branch
          %712 = sbr.rel (%p710) target = $region48
        $region47: #{tpu_custom_call.1} parent=31 // pred_region
          _
        $region48: #{tpu_custom_call.1} parent=31 // pred_fallthru
          _
      $region32: #{tpu_custom_call.1} parent=5 // pred_fallthru
        _
      %p713 = scmp.le.s32.totalorder 2, %s12
      // Predicated region
      $region49: #{tpu_custom_call.1} parent=5 // pred_check
        %p714 = pneg %p713
      $region50: #{tpu_custom_call.1} parent=5 // pred_check_branch
        %716 = sbr.rel (%p714) target = $region52
      $region51: #{tpu_custom_call.1} parent=5 // pred_region
        %s717 = ssub.s32 %s12, 2
        // Predicated region
        $region53: #{tpu_custom_call.1} parent=51 // pred_check
          %p718 = pneg %p123
        $region54: #{tpu_custom_call.1} parent=51 // pred_check_branch
          %720 = sbr.rel (%p718) target = $region56
        $region55: #{tpu_custom_call.1} parent=51 // pred_region
          %p721 = scmp.lt.s32.totalorder %s23, 1
          %s722 = scalar_select %p721, %s23, 1
          %s723 = smul.addr %s722, 4
          %s724 = smul.addr %s723, 8
          %s725 = scalar_lea.vmem %s3, %s724
        $region56: #{tpu_custom_call.1} parent=51 // pred_fallthru
          _
      $region52: #{tpu_custom_call.1} parent=5 // pred_fallthru
        _
    $region6: #{tpu_custom_call.1} parent=1 // loop_footer
      %s16 = sadd.s32 1, %s12
    $region7: #{tpu_custom_call.1} parent=1 // loop_footer_branch
      %11 = sbr.rel target = $region3
    $region8: #{tpu_custom_call.1} parent=1 // loop_exit
      _
    %726 = vsyncpa [#allocation5], 1
    %s727 = scalar_lea.sflag [#allocation5], 1
    %728 = vsyncpa %s727, 1

</llo_original>
